<compile_context>
chip_gen: v6e
topology: v6e:2x2x1
jax: 0.10.0
libtpu: 0.0.40
codegen_flags: <defaults>
</compile_context>

<pallas_src>
import functools

import numpy as np
import jax
import jax.numpy as jnp
from jax.experimental import pallas as pl
from jax.experimental.pallas import tpu as pltpu


# --------------------------------------------------------------------------- kernels
def _fused_kernel(x_ref, p_ref, tile_ref, maskc_ref, eye_ref,
                  w1_ref, w2_ref, b2_ref, o_ref):
    """Per-batch fused PSPSE: pool -> FC gate -> scale, all VMEM-resident.

    x_ref / o_ref blocks are (1, C, HW); everything else is a small resident
    constant or weight.  No in-kernel reshapes/transposes: the (C, dd) ->
    (1, C*dd) flatten uses TileMat/MaskC + a sublane reduction, and the
    (1, C) -> (C, 1) gate column uses eye(C) + a lane reduction.
    """
    xb = x_ref[0]                                                     # (C, HW)
    pooled = jnp.dot(xb, p_ref[...],
                     preferred_element_type=jnp.float32)              # (C, dd) f32
    z_full = jnp.dot(pooled, tile_ref[...],
                     preferred_element_type=jnp.float32) * maskc_ref[...]
    z = jnp.sum(z_full, axis=0, keepdims=True)                        # (1, C*dd)
    h = jnp.maximum(jnp.dot(z, w1_ref[...],
                            preferred_element_type=jnp.float32), 0.0)  # (1, int_ch)
    o = jnp.dot(h, w2_ref[...],
                preferred_element_type=jnp.float32) + b2_ref[...]      # (1, C)
    s = jax.nn.sigmoid(o)                                              # (1, C)
    s_col = jnp.sum(eye_ref[...] * s, axis=-1, keepdims=True)          # (C, 1)
    o_ref[0] = xb * s_col.astype(xb.dtype)


def _pool_kernel(x_ref, p_ref, pooled_ref):
    """Row-tiled adaptive average pool: (tile_r, HW) @ (HW, dd), f32 accumulate.

    No f32 upcast of the x tile and no Precision.HIGHEST (review item 3): P is
    pre-cast to x.dtype and the kernel stays cleanly DMA-bound regardless of
    MXU pass count.
    """
    pooled_ref[...] = jnp.dot(x_ref[...], p_ref[...],
                              preferred_element_type=jnp.float32)


def _fc_kernel(z_ref, w1_ref, w2_ref, b2_ref, s_ref):
    """Tiny FC head: fc1 (no bias) -> ReLU -> fc2 (+bias) -> sigmoid."""
    h = jnp.maximum(jnp.dot(z_ref[...], w1_ref[...],
                            preferred_element_type=jnp.float32), 0.0)
    o = jnp.dot(h, w2_ref[...], preferred_element_type=jnp.float32) + b2_ref[...]
    s_ref[...] = jax.nn.sigmoid(o).astype(s_ref.dtype)


def _scale_kernel(x_ref, s_ref, o_ref):
    """Row-tiled y = x * s.  The (B*C, 1) gate is a single resident VMEM block;
    the rows of the current tile are sliced in-kernel (no per-step gate DMA)."""
    tile_r = x_ref.shape[0]
    r0 = pl.multiple_of(pl.program_id(0) * tile_r, tile_r)
    o_ref[...] = x_ref[...] * s_ref[pl.ds(r0, tile_r), :]


# --------------------------------------------------------------------------- constants (numpy, lru_cached)
@functools.lru_cache(maxsize=None)
def _pool_matrix(H, W, d):
    """(H*W, d*d) averaging matrix: x2 @ P == AdaptiveAvgPool2d(d) flattened."""
    hh, ww = H // d, W // d
    win = ((np.arange(H) // hh)[:, None] * d
           + (np.arange(W) // ww)[None, :]).reshape(H * W)
    return np.asarray(win[:, None] == np.arange(d * d)[None, :],
                      np.float32) / float(hh * ww)


@functools.lru_cache(maxsize=None)
def _flatten_constants(C, dd):
    """Constants for the fused kernel's reshape-free flatten / gate extraction."""
    tile_mat = np.tile(np.eye(dd, dtype=np.float32), (1, C))      # (dd, C*dd)
    mask_c = np.repeat(np.eye(C, dtype=np.float32), dd, axis=1)   # (C, C*dd)
    eye_c = np.eye(C, dtype=np.float32)                           # (C, C)
    return tile_mat, mask_c, eye_c


# --------------------------------------------------------------------------- config
_FUSED_SLAB_BYTES = 4 << 20       # max per-batch (C, H*W) slab for the fused path


def _stream_config():
    """(tile_target_bytes, vmem_limit_bytes), generation-aware (review item 2)."""
    cap = 128 << 20
    try:
        cap = int(getattr(pltpu.get_tpu_info(), "vmem_capacity_bytes", cap))
    except Exception:
        pass
    if cap <= (64 << 20):              # v7x-class: 64 MiB VMEM, 3.2 TB/s HBM
        return 8 << 20, 48 << 20       #   bigger tiles amortize per-step overhead
    return 4 << 20, 32 << 20           # v5e / v6e: 4 MiB tiles already at plateau


def _choose_tile_rows(n_rows, row_bytes, itemsize, target_bytes):
    """Row-tile: dtype packed-sublane quantum, even division of n_rows, and
    >=4 grid steps when possible (review items 1 + 6)."""
    q = {4: 8, 2: 16, 1: 32}.get(int(itemsize), 8)
    if n_rows <= q or n_rows % q:
        return n_rows                               # single full-extent block
    budget = max((int(target_bytes // max(row_bytes, 1)) // q) * q, q)
    cap = max(((n_rows // 4) // q) * q, q)          # >=4 steps: 2 TCs x 2-deep pipe
    t = max(min(budget, cap), q)
    while n_rows % t:                               # even division -> no ragged step,
        t -= q                                      # no OOB on the resident gate slice
    return int(t)


def _fits_fused(C, HW, dd, itemsize, vmem_limit):
    slab = C * HW * itemsize                                    # one batch of x per step
    consts = (HW * dd + dd * C * dd + 2 * C * C * dd + C * C) * 4
    live = 4 * slab + consts                                    # 2x in + 2x out + consts
    return slab <= _FUSED_SLAB_BYTES and live <= (vmem_limit * 3) // 4


# --------------------------------------------------------------------------- forward
def pspse_forward(x, w1, w2, b2, d, *, tile_rows=None, fused=None):
    """PSPSE forward.

    x: (B, C, H, W);  w1: (C*d*d, int_ch) [fc1.weight.T, no bias];
    w2: (int_ch, C) [fc2.weight.T];  b2: (1, C) [fc2.bias].
    Requires H % d == 0 and W % d == 0.
    """
    B, C, H, W = x.shape
    if H % d or W % d:
        raise ValueError("PSPSE Pallas path requires H % d == 0 and W % d == 0")
    HW, dd = H * W, d * d
    int_ch = w1.shape[1]
    n_rows = B * C
    itemsize = jnp.dtype(x.dtype).itemsize
    tile_target, vmem_limit = _stream_config()

    # Averaging matrix in the input dtype (entries 1/(hh*ww): exact in bf16 for
    # power-of-two windows) -> no f32 upcast of the x tile inside the kernels.
    P = jnp.asarray(_pool_matrix(H, W, d), dtype=x.dtype)

    if fused is None:
        fused = _fits_fused(C, HW, dd, itemsize, vmem_limit)

    if fused:
        # ---- fast path: one fused kernel, grid over batches ("parallel") ----
        tile_mat, mask_c, eye_c = (jnp.asarray(a) for a in _flatten_constants(C, dd))
        x3 = x.reshape(B, C, HW)                       # contiguous view, free
        y3 = pl.pallas_call(
            _fused_kernel,
            out_shape=jax.ShapeDtypeStruct((B, C, HW), x.dtype),
            grid=(B,),                                 # B>=2 keeps both v7x TCs busy
            in_specs=[
                pl.BlockSpec((1, C, HW), lambda b: (b, 0, 0)),
                pl.BlockSpec((HW, dd), lambda b: (0, 0)),
                pl.BlockSpec((dd, C * dd), lambda b: (0, 0)),
                pl.BlockSpec((C, C * dd), lambda b: (0, 0)),
                pl.BlockSpec((C, C), lambda b: (0, 0)),
                pl.BlockSpec((C * dd, int_ch), lambda b: (0, 0)),
                pl.BlockSpec((int_ch, C), lambda b: (0, 0)),
                pl.BlockSpec((1, C), lambda b: (0, 0)),
            ],
            out_specs=pl.BlockSpec((1, C, HW), lambda b: (b, 0, 0)),
            compiler_params=pltpu.CompilerParams(
                dimension_semantics=("parallel",),
                vmem_limit_bytes=vmem_limit),
        )(x3, P, tile_mat, mask_c, eye_c, w1, w2, b2)
        return y3.reshape(B, C, H, W)

    # ---- streaming path: pool -> tiny FC -> scale (large x) ----
    x2 = x.reshape(n_rows, HW)                         # contiguous view, free
    row_bytes = HW * itemsize
    tile_r = tile_rows if tile_rows is not None else _choose_tile_rows(
        n_rows, row_bytes, itemsize, tile_target)
    tile_r = min(int(tile_r), n_rows)
    if n_rows % tile_r:
        raise ValueError(f"tile_rows={tile_r} must divide B*C={n_rows}")
    grid_r = n_rows // tile_r
    stream_params = pltpu.CompilerParams(
        dimension_semantics=("parallel",), vmem_limit_bytes=vmem_limit)

    # Kernel 1: streaming d*d adaptive average pool (lane-dense row tiles of x).
    pooled = pl.pallas_call(
        _pool_kernel,
        out_shape=jax.ShapeDtypeStruct((n_rows, dd), jnp.float32),
        grid=(grid_r,),
        in_specs=[pl.BlockSpec((tile_r, HW), lambda i: (i, 0)),
                  pl.BlockSpec((HW, dd), lambda i: (0, 0))],     # P resident
        out_specs=pl.BlockSpec((tile_r, dd), lambda i: (i, 0)),
        compiler_params=stream_params,
    )(x2, P)

    # Kernel 2: tiny FC head -> per-(batch, channel) gate.  Negligible next to
    # the HBM-bound streaming kernels that dominate on this path.
    z = pooled.reshape(B, C * dd)                      # host reshape: free
    s = pl.pallas_call(
        _fc_kernel,
        out_shape=jax.ShapeDtypeStruct((B, C), jnp.float32),
        grid=(1,),
        in_specs=[pl.BlockSpec((B, C * dd), lambda i: (0, 0)),
                  pl.BlockSpec((C * dd, int_ch), lambda i: (0, 0)),
                  pl.BlockSpec((int_ch, C), lambda i: (0, 0)),
                  pl.BlockSpec((1, C), lambda i: (0, 0))],
        out_specs=pl.BlockSpec((B, C), lambda i: (0, 0)),
        compiler_params=pltpu.CompilerParams(dimension_semantics=("arbitrary",)),
    )(z, w1, w2, b2)

    # Kernel 3: streaming channel-wise scaling; gate is one resident VMEM block.
    s_row = s.astype(x.dtype).reshape(n_rows, 1)       # host reshape: free
    y2 = pl.pallas_call(
        _scale_kernel,
        out_shape=jax.ShapeDtypeStruct((n_rows, HW), x.dtype),
        grid=(grid_r,),
        in_specs=[pl.BlockSpec((tile_r, HW), lambda i: (i, 0)),
                  pl.BlockSpec((n_rows, 1), lambda i: (0, 0))],  # resident gate
        out_specs=pl.BlockSpec((tile_r, HW), lambda i: (i, 0)),
        compiler_params=stream_params,
    )(x2, s_row)
    return y2.reshape(B, C, H, W)


# --------------------------------------------------------------------------- reference & test
def _pspse_reference(x, w1, w2, b2, d):
    """Pure-JAX mirror of the PyTorch forward (divisible adaptive pool)."""
    B, C, H, W = x.shape
    hh, ww = H // d, W // d
    z = x.reshape(B, C, d, hh, d, ww).mean(axis=(3, 5)).reshape(B, -1)
    h = jnp.maximum(z @ w1, 0.0)
    s = jax.nn.sigmoid(h @ w2 + b2)
    return x * s.reshape(B, C, 1, 1)


def _make_inputs(key, B, C, H, W, d, r=16):
    int_ch = max(C // r, 8)
    k1, k2, k3, k4 = jax.random.split(key, 4)
    x = jax.random.normal(k1, (B, C, H, W), jnp.float32)
    # PyTorch Linear weights stored transposed (in, out) so kernels compute z @ w.
    w1 = jax.random.normal(k2, (C * d * d, int_ch), jnp.float32) / jnp.sqrt(C * d * d)
    w2 = jax.random.normal(k3, (int_ch, C), jnp.float32) / jnp.sqrt(int_ch)
    b2 = jax.random.normal(k4, (1, C), jnp.float32) * 0.1
    return x, w1, w2, b2


if __name__ == "__main__":
    keys = jax.random.split(jax.random.PRNGKey(0), 4)

    # 1) Small config -> fused per-batch single-kernel path (grid=(B,), parallel).
    B, C, H, W, d = 2, 4, 16, 16, 2
    x, w1, w2, b2 = _make_inputs(keys[0], B, C, H, W, d)
    y = jax.block_until_ready(pspse_forward(x, w1, w2, b2, d))
    y_ref = _pspse_reference(x, w1, w2, b2, d)
    assert y.shape == (B, C, H, W)
    assert jnp.allclose(y, y_ref, atol=1e-4, rtol=1e-4), "fused f32 mismatch"

    # 2) Larger config, forced streaming 3-kernel path (auto tile -> 4 grid steps,
    #    resident gate sliced with pl.ds in-kernel).
    B, C, H, W, d = 2, 16, 32, 32, 2
    x, w1, w2, b2 = _make_inputs(keys[1], B, C, H, W, d)
    y = jax.block_until_ready(pspse_forward(x, w1, w2, b2, d, fused=False))
    y_ref = _pspse_reference(x, w1, w2, b2, d)
    assert jnp.allclose(y, y_ref, atol=1e-4, rtol=1e-4), "streaming f32 mismatch"

    # 3) bf16 input through the fused path (P cast to bf16; no f32 upcast in-kernel).
    B, C, H, W, d = 2, 4, 16, 16, 2
    x, w1, w2, b2 = _make_inputs(keys[2], B, C, H, W, d)
    x_bf = x.astype(jnp.bfloat16)
    y = jax.block_until_ready(pspse_forward(x_bf, w1, w2, b2, d))
    y_ref = _pspse_reference(x_bf.astype(jnp.float32), w1, w2, b2, d)
    assert jnp.allclose(y.astype(jnp.float32), y_ref, atol=2e-2, rtol=2e-2), \
        "fused bf16 mismatch"

    # 4) bf16 streaming path (exercises the 16-row packed-sublane tile quantum).
    B, C, H, W, d = 2, 16, 32, 32, 2
    x, w1, w2, b2 = _make_inputs(keys[3], B, C, H, W, d)
    x_bf = x.astype(jnp.bfloat16)
    y = jax.block_until_ready(pspse_forward(x_bf, w1, w2, b2, d, fused=False))
    y_ref = _pspse_reference(x_bf.astype(jnp.float32), w1, w2, b2, d)
    assert jnp.allclose(y.astype(jnp.float32), y_ref, atol=2e-2, rtol=2e-2), \
        "streaming bf16 mismatch"

    print("KERNEL_OK")
</pallas_src>

<mosaic_0001>
module attributes {stable_mosaic.version = 11 : i64} {
  func.func @_fused_kernel(%arg0: i32, %arg1: memref<1x4x256xf32, #tpu.memory_space<vmem>>, %arg2: memref<256x4xf32, #tpu.memory_space<vmem>>, %arg3: memref<4x16xf32, #tpu.memory_space<vmem>>, %arg4: memref<4x16xf32, #tpu.memory_space<vmem>>, %arg5: memref<4x4xf32, #tpu.memory_space<vmem>>, %arg6: memref<16x8xf32, #tpu.memory_space<vmem>>, %arg7: memref<8x4xf32, #tpu.memory_space<vmem>>, %arg8: memref<1x4xf32, #tpu.memory_space<vmem>>, %arg9: memref<1x4x256xf32, #tpu.memory_space<vmem>>) attributes {dimension_semantics = [#tpu.dimension_semantics<parallel>], iteration_bounds = array<i64: 2>, scalar_prefetch = 0 : i64, scratch_operands = 0 : i64, tpu.core_type = #tpu.core_type<tc>, window_params = [{transform_indices = @transform_0, window_bounds = array<i64: 1, 4, 256>}, {pipeline_mode = #tpu.pipeline_mode<synchronous>, transform_indices = @transform_1, window_bounds = array<i64: 256, 4>}, {pipeline_mode = #tpu.pipeline_mode<synchronous>, transform_indices = @transform_2, window_bounds = array<i64: 4, 16>}, {pipeline_mode = #tpu.pipeline_mode<synchronous>, transform_indices = @transform_3, window_bounds = array<i64: 4, 16>}, {pipeline_mode = #tpu.pipeline_mode<synchronous>, transform_indices = @transform_4, window_bounds = array<i64: 4, 4>}, {pipeline_mode = #tpu.pipeline_mode<synchronous>, transform_indices = @transform_5, window_bounds = array<i64: 16, 8>}, {pipeline_mode = #tpu.pipeline_mode<synchronous>, transform_indices = @transform_6, window_bounds = array<i64: 8, 4>}, {pipeline_mode = #tpu.pipeline_mode<synchronous>, transform_indices = @transform_7, window_bounds = array<i64: 1, 4>}, {transform_indices = @transform_8, window_bounds = array<i64: 1, 4, 256>}]} {
    %c0 = arith.constant 0 : index
    %c0_0 = arith.constant 0 : index
    %c0_1 = arith.constant 0 : index
    %0 = vector.load %arg1[%c0, %c0_0, %c0_1] : memref<1x4x256xf32, #tpu.memory_space<vmem>>, vector<1x4x256xf32>
    %1 = vector.shape_cast %0 : vector<1x4x256xf32> to vector<4x256xf32>
    %c0_2 = arith.constant 0 : index
    %c0_3 = arith.constant 0 : index
    %2 = vector.load %arg2[%c0_2, %c0_3] : memref<256x4xf32, #tpu.memory_space<vmem>>, vector<256x4xf32>
    %cst = arith.constant dense<0.000000e+00> : vector<4x4xf32>
    %3 = tpu.matmul %1, %2, %cst {dimension_numbers = #tpu.dot_dimension_numbers<[1], [0], [0], [1], [0, 0, 1, 1], [], []>} : vector<4x256xf32>, vector<256x4xf32>, vector<4x4xf32> -> vector<4x4xf32>
    %c0_4 = arith.constant 0 : index
    %c0_5 = arith.constant 0 : index
    %4 = vector.load %arg3[%c0_4, %c0_5] : memref<4x16xf32, #tpu.memory_space<vmem>>, vector<4x16xf32>
    %cst_6 = arith.constant dense<0.000000e+00> : vector<4x16xf32>
    %5 = tpu.matmul %3, %4, %cst_6 {dimension_numbers = #tpu.dot_dimension_numbers<[1], [0], [0], [1], [0, 0, 1, 1], [], []>} : vector<4x4xf32>, vector<4x16xf32>, vector<4x16xf32> -> vector<4x16xf32>
    %c0_7 = arith.constant 0 : index
    %c0_8 = arith.constant 0 : index
    %6 = vector.load %arg4[%c0_7, %c0_8] : memref<4x16xf32, #tpu.memory_space<vmem>>, vector<4x16xf32>
    %7 = arith.mulf %5, %6 : vector<4x16xf32>
    %cst_9 = arith.constant dense<0.000000e+00> : vector<16xf32>
    %8 = vector.multi_reduction <add>, %7, %cst_9 [0] : vector<4x16xf32> to vector<16xf32>
    %9 = vector.shape_cast %8 : vector<16xf32> to vector<1x16xf32>
    %c0_10 = arith.constant 0 : index
    %c0_11 = arith.constant 0 : index
    %10 = vector.load %arg6[%c0_10, %c0_11] : memref<16x8xf32, #tpu.memory_space<vmem>>, vector<16x8xf32>
    %cst_12 = arith.constant dense<0.000000e+00> : vector<1x8xf32>
    %11 = tpu.matmul %9, %10, %cst_12 {dimension_numbers = #tpu.dot_dimension_numbers<[1], [0], [0], [1], [0, 0, 1, 1], [], []>} : vector<1x16xf32>, vector<16x8xf32>, vector<1x8xf32> -> vector<1x8xf32>
    %cst_13 = arith.constant 0.000000e+00 : f32
    %12 = vector.broadcast %cst_13 : f32 to vector<1x8xf32>
    %13 = arith.maximumf %11, %12 : vector<1x8xf32>
    %c0_14 = arith.constant 0 : index
    %c0_15 = arith.constant 0 : index
    %14 = vector.load %arg7[%c0_14, %c0_15] : memref<8x4xf32, #tpu.memory_space<vmem>>, vector<8x4xf32>
    %cst_16 = arith.constant dense<0.000000e+00> : vector<1x4xf32>
    %15 = tpu.matmul %13, %14, %cst_16 {dimension_numbers = #tpu.dot_dimension_numbers<[1], [0], [0], [1], [0, 0, 1, 1], [], []>} : vector<1x8xf32>, vector<8x4xf32>, vector<1x4xf32> -> vector<1x4xf32>
    %c0_17 = arith.constant 0 : index
    %c0_18 = arith.constant 0 : index
    %16 = vector.load %arg8[%c0_17, %c0_18] : memref<1x4xf32, #tpu.memory_space<vmem>>, vector<1x4xf32>
    %17 = arith.addf %15, %16 : vector<1x4xf32>
    %18 = arith.negf %17 : vector<1x4xf32>
    %19 = math.exp %18 : vector<1x4xf32>
    %cst_19 = arith.constant 1.000000e+00 : f32
    %20 = vector.broadcast %cst_19 : f32 to vector<1x4xf32>
    %21 = arith.addf %20, %19 : vector<1x4xf32>
    %22 = arith.divf %20, %21 : vector<1x4xf32>
    %c0_20 = arith.constant 0 : index
    %c0_21 = arith.constant 0 : index
    %23 = vector.load %arg5[%c0_20, %c0_21] : memref<4x4xf32, #tpu.memory_space<vmem>>, vector<4x4xf32>
    %24 = vector.broadcast %22 : vector<1x4xf32> to vector<4x4xf32>
    %25 = arith.mulf %23, %24 : vector<4x4xf32>
    %cst_22 = arith.constant dense<0.000000e+00> : vector<4xf32>
    %26 = vector.multi_reduction <add>, %25, %cst_22 [1] : vector<4x4xf32> to vector<4xf32>
    %27 = vector.shape_cast %26 : vector<4xf32> to vector<4x1xf32>
    %28 = vector.broadcast %27 : vector<4x1xf32> to vector<4x256xf32>
    %29 = arith.mulf %1, %28 : vector<4x256xf32>
    %c0_23 = arith.constant 0 : index
    %c0_24 = arith.constant 0 : index
    %c0_25 = arith.constant 0 : index
    %30 = vector.load %arg9[%c0_23, %c0_24, %c0_25] : memref<1x4x256xf32, #tpu.memory_space<vmem>>, vector<1x4x256xf32>
    %31 = vector.shape_cast %30 : vector<1x4x256xf32> to vector<4x256xf32>
    %32 = vector.shape_cast %29 : vector<4x256xf32> to vector<1x4x256xf32>
    tpu.vector_store %arg9[%c0_23, %c0_24, %c0_25], %32 {strides = array<i32>} : memref<1x4x256xf32, #tpu.memory_space<vmem>>, vector<1x4x256xf32>,
    return
  }
  func.func @transform_0(%arg0: i32) -> (i32, i32, i32) {
    %c0_i32 = arith.constant 0 : i32
    %c0_i32_0 = arith.constant 0 : i32
    %c0_i32_1 = arith.constant 0 : i32
    return %arg0, %c0_i32, %c0_i32_0 : i32, i32, i32
  }
  func.func @transform_1(%arg0: i32) -> (i32, i32) {
    %c0_i32 = arith.constant 0 : i32
    %c0_i32_0 = arith.constant 0 : i32
    %c0_i32_1 = arith.constant 0 : i32
    return %c0_i32, %c0_i32_0 : i32, i32
  }
  func.func @transform_2(%arg0: i32) -> (i32, i32) {
    %c0_i32 = arith.constant 0 : i32
    %c0_i32_0 = arith.constant 0 : i32
    %c0_i32_1 = arith.constant 0 : i32
    return %c0_i32, %c0_i32_0 : i32, i32
  }
  func.func @transform_3(%arg0: i32) -> (i32, i32) {
    %c0_i32 = arith.constant 0 : i32
    %c0_i32_0 = arith.constant 0 : i32
    %c0_i32_1 = arith.constant 0 : i32
    return %c0_i32, %c0_i32_0 : i32, i32
  }
  func.func @transform_4(%arg0: i32) -> (i32, i32) {
    %c0_i32 = arith.constant 0 : i32
    %c0_i32_0 = arith.constant 0 : i32
    %c0_i32_1 = arith.constant 0 : i32
    return %c0_i32, %c0_i32_0 : i32, i32
  }
  func.func @transform_5(%arg0: i32) -> (i32, i32) {
    %c0_i32 = arith.constant 0 : i32
    %c0_i32_0 = arith.constant 0 : i32
    %c0_i32_1 = arith.constant 0 : i32
    return %c0_i32, %c0_i32_0 : i32, i32
  }
  func.func @transform_6(%arg0: i32) -> (i32, i32) {
    %c0_i32 = arith.constant 0 : i32
    %c0_i32_0 = arith.constant 0 : i32
    %c0_i32_1 = arith.constant 0 : i32
    return %c0_i32, %c0_i32_0 : i32, i32
  }
  func.func @transform_7(%arg0: i32) -> (i32, i32) {
    %c0_i32 = arith.constant 0 : i32
    %c0_i32_0 = arith.constant 0 : i32
    %c0_i32_1 = arith.constant 0 : i32
    return %c0_i32, %c0_i32_0 : i32, i32
  }
  func.func @transform_8(%arg0: i32) -> (i32, i32, i32) {
    %c0_i32 = arith.constant 0 : i32
    %c0_i32_0 = arith.constant 0 : i32
    %c0_i32_1 = arith.constant 0 : i32
    return %arg0, %c0_i32, %c0_i32_0 : i32, i32, i32
  }
}

</mosaic_0001>

<llo_original>
// kernel: tpu_custom_call.1
$region0: #{tpu_custom_call.1}
  #allocation0 [shape = 'u32[]', space=smem, size = 0x4, offset = 0x4, fixed_abs, tag = 'smem constant byte address 0x4 - core index']
  #allocation1 [shape = 'u32[144,128]{1,0:T(1,128)}', space=vmem, size = 0x12000, scoped, tag = 'internal scratch']
  %s0 = inlined_call_operand.vmem [shape: f32[2,4,256], index: 0, kind: input, shape index: {}]
  %s1 = inlined_call_operand.vmem [shape: f32[256,4], index: 1, kind: input, shape index: {}]
  %s2 = inlined_call_operand.vmem [shape: f32[4,16], index: 2, kind: input, shape index: {}]
  %s3 = inlined_call_operand.vmem [shape: f32[4,16], index: 3, kind: input, shape index: {}]
  %s4 = inlined_call_operand.vmem [shape: f32[4,4], index: 4, kind: input, shape index: {}]
  %s5 = inlined_call_operand.vmem [shape: f32[16,8], index: 5, kind: input, shape index: {}]
  %s6 = inlined_call_operand.vmem [shape: f32[8,4], index: 6, kind: input, shape index: {}]
  %s7 = inlined_call_operand.vmem [shape: f32[1,4], index: 7, kind: input, shape index: {}]
  %s8 = inlined_call_operand.hbm [shape: f32[2,4,256], index: 8, kind: output, shape index: {}]
  %s9 = sld [smem:[#allocation0]]
  $region65: #{tpu_custom_call.1} parent=0
    _
  %s11 = ssub.s32 1, %s9
  %s12 = scalar_select 0, %s11, %s9
  $region1: #{tpu_custom_call.1} parent=0
    #allocation2 [shape = 'u8[8192]{0}', space=vmem, size = 0x2000, scoped, tag = 'output window, operand 0']
    #allocation3 [shape = 's32[2]{0}', space=sflag, size = 0x8, scoped, tag = 'scoped memory for tpu_custom_call.1']
    %13 = vsyncpa [#allocation3], 0
    %s14 = scalar_lea.sflag [#allocation3], 1
    %15 = vsyncpa %s14, 0
    loop: start=0, step=1, limit=4
    $region2: #{tpu_custom_call.1} parent=1 // loop_pre_header
      _
    $region3: #{tpu_custom_call.1} parent=1 // loop_header
      %s17 = sphi 0, %s21
      %p18 = scmp.ge.s32.totalorder %s17, 4
      %s27 = sphi 0, %s29
      %s30 = sphi 0, %s27
      %s31 = sphi 0, %s30
      %s47 = sphi 0, %s31
      %s51 = sphi 0, %s51
      %s53 = sphi 0, %s51
      %s54 = sphi 0, %s53
      %s68 = sphi 0, %s54
      %s72 = sphi 0, %s72
      %s74 = sphi 0, %s72
      %s75 = sphi 0, %s74
      %s89 = sphi 0, %s75
      %s93 = sphi 0, %s93
      %s95 = sphi 0, %s93
      %s96 = sphi 0, %s95
      %s110 = sphi 0, %s96
      %s114 = sphi 0, %s114
      %s116 = sphi 0, %s114
      %s117 = sphi 0, %s116
      %s131 = sphi 0, %s117
      %s135 = sphi 0, %s135
      %s137 = sphi 0, %s135
      %s138 = sphi 0, %s137
      %s152 = sphi 0, %s138
      %s156 = sphi 0, %s156
      %s158 = sphi 0, %s156
      %s159 = sphi 0, %s158
      %s173 = sphi 0, %s159
      %s177 = sphi 0, %s177
      %s179 = sphi 0, %s177
      %s180 = sphi 0, %s179
      %s194 = sphi 0, %s180
      %s200 = sphi 0, %s202
      %s203 = sphi 0, %s200
      %s204 = sphi 0, %s203
      %s220 = sphi 0, %s204
    $region4: #{tpu_custom_call.1} parent=1 // loop_header_branch
      %20 = sbr.rel (%p18) target = $region8
    $region5: #{tpu_custom_call.1} parent=1 // loop_body
      %s22 = ssub.s32 %s17, 1
      %s23 = ssub.s32 %s17, 2
      %s24 = sadd.s32 %s17, 1
      %s25 = ssub.s32 %s17, %s24
      %p26 = scmp.eq.s32.totalorder %s25, 0
      %s28 = sadd.s32 %s27, 1
      %s29 = scalar_select %p26, %s27, %s28
      %p32 = pneg %p26
      %p33 = scmp.eq.s32.totalorder %s17, 1
      %p34 = por %p32, %p33
      %p35 = scmp.ne.s32.totalorder %s27, %s30
      %p36 = scmp.eq.s32.totalorder %s17, 0
      %p37 = por %p35, %p36
      %p38 = scmp.ne.s32.totalorder %s27, %s30
      %p39 = scmp.eq.s32.totalorder %s22, 1
      %p40 = por %p38, %p39
      %p41 = scmp.ne.s32.totalorder %s30, %s31
      %p42 = scmp.eq.s32.totalorder %s22, 0
      %p43 = por %p41, %p42
      %p44 = scmp.ne.s32.totalorder %s30, %s31
      %p45 = scmp.eq.s32.totalorder %s23, 1
      %p46 = por %p44, %p45
      %p48 = scmp.ne.s32.totalorder %s31, %s47
      %p49 = scmp.eq.s32.totalorder %s23, 0
      %p50 = por %p48, %p49
      %s52 = sadd.s32 %s51, 1
      %p55 = scmp.eq.s32.totalorder %s17, 1
      %p56 = scmp.ne.s32.totalorder %s51, %s53
      %p57 = scmp.eq.s32.totalorder %s17, 0
      %p58 = por %p56, %p57
      %p59 = scmp.ne.s32.totalorder %s51, %s53
      %p60 = scmp.eq.s32.totalorder %s22, 1
      %p61 = por %p59, %p60
      %p62 = scmp.ne.s32.totalorder %s53, %s54
      %p63 = scmp.eq.s32.totalorder %s22, 0
      %p64 = por %p62, %p63
      %p65 = scmp.ne.s32.totalorder %s53, %s54
      %p66 = scmp.eq.s32.totalorder %s23, 1
      %p67 = por %p65, %p66
      %p69 = scmp.ne.s32.totalorder %s54, %s68
      %p70 = scmp.eq.s32.totalorder %s23, 0
      %p71 = por %p69, %p70
      %s73 = sadd.s32 %s72, 1
      %p76 = scmp.eq.s32.totalorder %s17, 1
      %p77 = scmp.ne.s32.totalorder %s72, %s74
      %p78 = scmp.eq.s32.totalorder %s17, 0
      %p79 = por %p77, %p78
      %p80 = scmp.ne.s32.totalorder %s72, %s74
      %p81 = scmp.eq.s32.totalorder %s22, 1
      %p82 = por %p80, %p81
      %p83 = scmp.ne.s32.totalorder %s74, %s75
      %p84 = scmp.eq.s32.totalorder %s22, 0
      %p85 = por %p83, %p84
      %p86 = scmp.ne.s32.totalorder %s74, %s75
      %p87 = scmp.eq.s32.totalorder %s23, 1
      %p88 = por %p86, %p87
      %p90 = scmp.ne.s32.totalorder %s75, %s89
      %p91 = scmp.eq.s32.totalorder %s23, 0
      %p92 = por %p90, %p91
      %s94 = sadd.s32 %s93, 1
      %p97 = scmp.eq.s32.totalorder %s17, 1
      %p98 = scmp.ne.s32.totalorder %s93, %s95
      %p99 = scmp.eq.s32.totalorder %s17, 0
      %p100 = por %p98, %p99
      %p101 = scmp.ne.s32.totalorder %s93, %s95
      %p102 = scmp.eq.s32.totalorder %s22, 1
      %p103 = por %p101, %p102
      %p104 = scmp.ne.s32.totalorder %s95, %s96
      %p105 = scmp.eq.s32.totalorder %s22, 0
      %p106 = por %p104, %p105
      %p107 = scmp.ne.s32.totalorder %s95, %s96
      %p108 = scmp.eq.s32.totalorder %s23, 1
      %p109 = por %p107, %p108
      %p111 = scmp.ne.s32.totalorder %s96, %s110
      %p112 = scmp.eq.s32.totalorder %s23, 0
      %p113 = por %p111, %p112
      %s115 = sadd.s32 %s114, 1
      %p118 = scmp.eq.s32.totalorder %s17, 1
      %p119 = scmp.ne.s32.totalorder %s114, %s116
      %p120 = scmp.eq.s32.totalorder %s17, 0
      %p121 = por %p119, %p120
      %p122 = scmp.ne.s32.totalorder %s114, %s116
      %p123 = scmp.eq.s32.totalorder %s22, 1
      %p124 = por %p122, %p123
      %p125 = scmp.ne.s32.totalorder %s116, %s117
      %p126 = scmp.eq.s32.totalorder %s22, 0
      %p127 = por %p125, %p126
      %p128 = scmp.ne.s32.totalorder %s116, %s117
      %p129 = scmp.eq.s32.totalorder %s23, 1
      %p130 = por %p128, %p129
      %p132 = scmp.ne.s32.totalorder %s117, %s131
      %p133 = scmp.eq.s32.totalorder %s23, 0
      %p134 = por %p132, %p133
      %s136 = sadd.s32 %s135, 1
      %p139 = scmp.eq.s32.totalorder %s17, 1
      %p140 = scmp.ne.s32.totalorder %s135, %s137
      %p141 = scmp.eq.s32.totalorder %s17, 0
      %p142 = por %p140, %p141
      %p143 = scmp.ne.s32.totalorder %s135, %s137
      %p144 = scmp.eq.s32.totalorder %s22, 1
      %p145 = por %p143, %p144
      %p146 = scmp.ne.s32.totalorder %s137, %s138
      %p147 = scmp.eq.s32.totalorder %s22, 0
      %p148 = por %p146, %p147
      %p149 = scmp.ne.s32.totalorder %s137, %s138
      %p150 = scmp.eq.s32.totalorder %s23, 1
      %p151 = por %p149, %p150
      %p153 = scmp.ne.s32.totalorder %s138, %s152
      %p154 = scmp.eq.s32.totalorder %s23, 0
      %p155 = por %p153, %p154
      %s157 = sadd.s32 %s156, 1
      %p160 = scmp.eq.s32.totalorder %s17, 1
      %p161 = scmp.ne.s32.totalorder %s156, %s158
      %p162 = scmp.eq.s32.totalorder %s17, 0
      %p163 = por %p161, %p162
      %p164 = scmp.ne.s32.totalorder %s156, %s158
      %p165 = scmp.eq.s32.totalorder %s22, 1
      %p166 = por %p164, %p165
      %p167 = scmp.ne.s32.totalorder %s158, %s159
      %p168 = scmp.eq.s32.totalorder %s22, 0
      %p169 = por %p167, %p168
      %p170 = scmp.ne.s32.totalorder %s158, %s159
      %p171 = scmp.eq.s32.totalorder %s23, 1
      %p172 = por %p170, %p171
      %p174 = scmp.ne.s32.totalorder %s159, %s173
      %p175 = scmp.eq.s32.totalorder %s23, 0
      %p176 = por %p174, %p175
      %s178 = sadd.s32 %s177, 1
      %p181 = scmp.eq.s32.totalorder %s17, 1
      %p182 = scmp.ne.s32.totalorder %s177, %s179
      %p183 = scmp.eq.s32.totalorder %s17, 0
      %p184 = por %p182, %p183
      %p185 = scmp.ne.s32.totalorder %s177, %s179
      %p186 = scmp.eq.s32.totalorder %s22, 1
      %p187 = por %p185, %p186
      %p188 = scmp.ne.s32.totalorder %s179, %s180
      %p189 = scmp.eq.s32.totalorder %s22, 0
      %p190 = por %p188, %p189
      %p191 = scmp.ne.s32.totalorder %s179, %s180
      %p192 = scmp.eq.s32.totalorder %s23, 1
      %p193 = por %p191, %p192
      %p195 = scmp.ne.s32.totalorder %s180, %s194
      %p196 = scmp.eq.s32.totalorder %s23, 0
      %p197 = por %p195, %p196
      %s198 = ssub.s32 %s17, %s24
      %p199 = scmp.eq.s32.totalorder %s198, 0
      %s201 = sadd.s32 %s200, 1
      %s202 = scalar_select %p199, %s200, %s201
      %p205 = pneg %p199
      %p206 = scmp.eq.s32.totalorder %s17, 1
      %p207 = por %p205, %p206
      %p208 = scmp.ne.s32.totalorder %s200, %s203
      %p209 = scmp.eq.s32.totalorder %s17, 0
      %p210 = por %p208, %p209
      %p211 = scmp.ne.s32.totalorder %s200, %s203
      %p212 = scmp.eq.s32.totalorder %s22, 1
      %p213 = por %p211, %p212
      %p214 = scmp.ne.s32.totalorder %s203, %s204
      %p215 = scmp.eq.s32.totalorder %s22, 0
      %p216 = por %p214, %p215
      %p217 = scmp.ne.s32.totalorder %s203, %s204
      %p218 = scmp.eq.s32.totalorder %s23, 1
      %p219 = por %p217, %p218
      %p221 = scmp.ne.s32.totalorder %s204, %s220
      %p222 = scmp.eq.s32.totalorder %s23, 0
      %p223 = por %p221, %p222
      %p224 = scmp.le.s32.totalorder 1, %s17
      %p225 = scmp.lt.s32.totalorder %s17, 3
      %p226 = pnand %p224, %p225
      %p227 = pneg %p226
      // Predicated region
      $region9: #{tpu_custom_call.1} parent=5 // pred_check
        _
      $region10: #{tpu_custom_call.1} parent=5 // pred_check_branch
        %229 = sbr.rel (%p226) target = $region12
      $region11: #{tpu_custom_call.1} parent=5 // pred_region
        %s230 = ssub.s32 %s17, 1
        // Predicated region
        $region13: #{tpu_custom_call.1} parent=11 // pred_check
          %p231 = pneg %p64
        $region14: #{tpu_custom_call.1} parent=11 // pred_check_branch
          %233 = sbr.rel (%p231) target = $region16
        $region15: #{tpu_custom_call.1} parent=11 // pred_region
          _
        $region16: #{tpu_custom_call.1} parent=11 // pred_fallthru
          _
        // Predicated region
        $region17: #{tpu_custom_call.1} parent=11 // pred_check
          %p234 = pneg %p85
        $region18: #{tpu_custom_call.1} parent=11 // pred_check_branch
          %236 = sbr.rel (%p234) target = $region20
        $region19: #{tpu_custom_call.1} parent=11 // pred_region
          _
        $region20: #{tpu_custom_call.1} parent=11 // pred_fallthru
          _
        // Predicated region
        $region21: #{tpu_custom_call.1} parent=11 // pred_check
          %p237 = pneg %p106
        $region22: #{tpu_custom_call.1} parent=11 // pred_check_branch
          %239 = sbr.rel (%p237) target = $region24
        $region23: #{tpu_custom_call.1} parent=11 // pred_region
          _
        $region24: #{tpu_custom_call.1} parent=11 // pred_fallthru
          _
        // Predicated region
        $region25: #{tpu_custom_call.1} parent=11 // pred_check
          %p240 = pneg %p127
        $region26: #{tpu_custom_call.1} parent=11 // pred_check_branch
          %242 = sbr.rel (%p240) target = $region28
        $region27: #{tpu_custom_call.1} parent=11 // pred_region
          _
        $region28: #{tpu_custom_call.1} parent=11 // pred_fallthru
          _
        // Predicated region
        $region29: #{tpu_custom_call.1} parent=11 // pred_check
          %p243 = pneg %p148
        $region30: #{tpu_custom_call.1} parent=11 // pred_check_branch
          %245 = sbr.rel (%p243) target = $region32
        $region31: #{tpu_custom_call.1} parent=11 // pred_region
          _
        $region32: #{tpu_custom_call.1} parent=11 // pred_fallthru
          _
        // Predicated region
        $region33: #{tpu_custom_call.1} parent=11 // pred_check
          %p246 = pneg %p169
        $region34: #{tpu_custom_call.1} parent=11 // pred_check_branch
          %248 = sbr.rel (%p246) target = $region36
        $region35: #{tpu_custom_call.1} parent=11 // pred_region
          _
        $region36: #{tpu_custom_call.1} parent=11 // pred_fallthru
          _
        // Predicated region
        $region37: #{tpu_custom_call.1} parent=11 // pred_check
          %p249 = pneg %p190
        $region38: #{tpu_custom_call.1} parent=11 // pred_check_branch
          %251 = sbr.rel (%p249) target = $region40
        $region39: #{tpu_custom_call.1} parent=11 // pred_region
          _
        $region40: #{tpu_custom_call.1} parent=11 // pred_fallthru
          _
      $region12: #{tpu_custom_call.1} parent=5 // pred_fallthru
        _
      %p252 = scmp.lt.s32.totalorder %s17, 2
      // Predicated region
      $region41: #{tpu_custom_call.1} parent=5 // pred_check
        %p253 = pneg %p252
      $region42: #{tpu_custom_call.1} parent=5 // pred_check_branch
        %255 = sbr.rel (%p253) target = $region44
      $region43: #{tpu_custom_call.1} parent=5 // pred_region
        // Predicated region
        $region45: #{tpu_custom_call.1} parent=43 // pred_check
          %p256 = pneg %p37
        $region46: #{tpu_custom_call.1} parent=43 // pred_check_branch
          %258 = sbr.rel (%p256) target = $region48
        $region47: #{tpu_custom_call.1} parent=43 // pred_region
          %p259 = scmp.lt.s32.totalorder %s17, 1
          %s260 = scalar_select %p259, %s17, 1
          %s261 = smul.addr %s260, 2
          %s262 = smul.addr %s261, 4
          %s263 = scalar_lea.vmem %s0, %s262
        $region48: #{tpu_custom_call.1} parent=43 // pred_fallthru
          _
      $region44: #{tpu_custom_call.1} parent=5 // pred_fallthru
        _
      %p264 = scmp.le.s32.totalorder 1, %s17
      %p265 = scmp.lt.s32.totalorder %s17, 3
      %p266 = pnand %p264, %p265
      %p267 = pneg %p266
      // Predicated region
      $region49: #{tpu_custom_call.1} parent=5 // pred_check
        _
      $region50: #{tpu_custom_call.1} parent=5 // pred_check_branch
        %269 = sbr.rel (%p266) target = $region52
      $region51: #{tpu_custom_call.1} parent=5 // pred_region
        %s270 = ssub.s32 %s17, 1
        %p271 = scmp.lt.s32.totalorder %s22, 1
        %s272 = scalar_select %p271, %s22, 1
        %s273 = smul.addr %s272, 2
        %s274 = smul.addr %s273, 4
        %s275 = scalar_lea.vmem %s0, %s274
        %p276 = pneg %p43
        %p277 = pneg %p40
        %p278 = pneg %p64
        %p279 = pneg %p61
        %p280 = pneg %p85
        %p281 = pneg %p82
        %p282 = pneg %p106
        %p283 = pneg %p103
        %p284 = pneg %p127
        %p285 = pneg %p124
        %p286 = pneg %p148
        %p287 = pneg %p145
        %p288 = pneg %p169
        %p289 = pneg %p166
        %p290 = pneg %p190
        %p291 = pneg %p187
        %p292 = pneg %p216
        %p293 = pneg %p213
        %s294 = sand.u32 %s203, 1
        %s295 = scalar_lea.sflag [#allocation3], %s294
        %s296 = sand.u32 %s203, 1
        %s297 = smul.addr %s296, 8
        %s298 = scalar_lea.vmem [#allocation2], %s297
        %p299 = scmp.lt.s32.totalorder %s22, 1
        %s300 = scalar_select %p299, %s22, 1
        %s301 = smul.addr %s300, 2
        %s302 = smul.addr %s301, 4
        %s303 = scalar_lea.vmem %s0, %s302
        %v304 = vld [vmem:[%s303] sm:$0xff]
        %v305 = vld [vmem:[%s1] sm:$0xff]
        %v306 = vld [vmem:[%s1 + $0x8] sm:$0xff]
        %v307 = vld [vmem:[%s1 + $0x10] sm:$0xff]
        %v308 = vld [vmem:[%s1 + $0x18] sm:$0xff]
        %v309 = vld [vmem:[%s1 + $0x20] sm:$0xff]
        %v310 = vld [vmem:[%s1 + $0x28] sm:$0xff]
        %v311 = vld [vmem:[%s1 + $0x30] sm:$0xff]
        %v312 = vld [vmem:[%s1 + $0x38] sm:$0xff]
        %v313 = vld [vmem:[%s1 + $0x40] sm:$0xff]
        %v314 = vld [vmem:[%s1 + $0x48] sm:$0xff]
        %v315 = vld [vmem:[%s1 + $0x50] sm:$0xff]
        %v316 = vld [vmem:[%s1 + $0x58] sm:$0xff]
        %v317 = vld [vmem:[%s1 + $0x60] sm:$0xff]
        %v318 = vld [vmem:[%s1 + $0x68] sm:$0xff]
        %v319 = vld [vmem:[%s1 + $0x70] sm:$0xff]
        %v320 = vld [vmem:[%s1 + $0x78] sm:$0xff]
        %v321 = vld [vmem:[%s1 + $0x80] sm:$0xff]
        %v322 = vld [vmem:[%s1 + $0x88] sm:$0xff]
        %v323 = vld [vmem:[%s1 + $0x90] sm:$0xff]
        %v324 = vld [vmem:[%s1 + $0x98] sm:$0xff]
        %v325 = vld [vmem:[%s1 + $0xa0] sm:$0xff]
        %v326 = vld [vmem:[%s1 + $0xa8] sm:$0xff]
        %v327 = vld [vmem:[%s1 + $0xb0] sm:$0xff]
        %v328 = vld [vmem:[%s1 + $0xb8] sm:$0xff]
        %v329 = vld [vmem:[%s1 + $0xc0] sm:$0xff]
        %v330 = vld [vmem:[%s1 + $0xc8] sm:$0xff]
        %v331 = vld [vmem:[%s1 + $0xd0] sm:$0xff]
        %v332 = vld [vmem:[%s1 + $0xd8] sm:$0xff]
        %v333 = vld [vmem:[%s1 + $0xe0] sm:$0xff]
        %v334 = vld [vmem:[%s1 + $0xe8] sm:$0xff]
        %v335 = vld [vmem:[%s1 + $0xf0] sm:$0xff]
        %v336 = vld [vmem:[%s1 + $0xf8] sm:$0xff]
        %v338 = vcombine.high %v304, %v304
        %340 = vmatprep.subr.mxu0 0.0
        %341 = vmatpush1.msra.mxu0 %v320
        %342 = vmatprep.subr.mxu0 0.0
        %343 = vmatpush1.msra.mxu0 %v319
        %344 = vmatprep.subr.mxu0 0.0
        %345 = vmatpush1.msra.mxu0 %v318
        %346 = vmatprep.subr.mxu0 0.0
        %347 = vmatpush1.msra.mxu0 %v317
        %348 = vmatprep.subr.mxu0 0.0
        %349 = vmatpush1.msra.mxu0 %v316
        %350 = vmatprep.subr.mxu0 0.0
        %351 = vmatpush1.msra.mxu0 %v315
        %352 = vmatprep.subr.mxu0 0.0
        %353 = vmatpush1.msra.mxu0 %v314
        %354 = vmatprep.subr.mxu0 0.0
        %355 = vmatpush1.msra.mxu0 %v313
        %356 = vmatprep.subr.mxu0 0.0
        %357 = vmatpush1.msra.mxu0 %v312
        %358 = vmatprep.subr.mxu0 0.0
        %359 = vmatpush1.msra.mxu0 %v311
        %360 = vmatprep.subr.mxu0 0.0
        %361 = vmatpush1.msra.mxu0 %v310
        %362 = vmatprep.subr.mxu0 0.0
        %363 = vmatpush1.msra.mxu0 %v309
        %364 = vmatprep.subr.mxu0 0.0
        %365 = vmatpush1.msra.mxu0 %v308
        %366 = vmatprep.subr.mxu0 0.0
        %367 = vmatpush1.msra.mxu0 %v307
        %368 = vmatprep.subr.mxu0 0.0
        %369 = vmatpush1.msra.mxu0 %v306
        %370 = vmatprep.subr.mxu0 0.0
        %371 = vmatpush1.msra.mxu0 %v305
        %372 = vmatprep.subr.mxu0 0.0
        %373 = vmatpush2.msra.mxu0 %v336
        %374 = vmatprep.subr.mxu0 0.0
        %375 = vmatpush2.msra.mxu0 %v335
        %376 = vmatprep.subr.mxu0 0.0
        %377 = vmatpush2.msra.mxu0 %v334
        %378 = vmatprep.subr.mxu0 0.0
        %379 = vmatpush2.msra.mxu0 %v333
        %380 = vmatprep.subr.mxu0 0.0
        %381 = vmatpush2.msra.mxu0 %v332
        %382 = vmatprep.subr.mxu0 0.0
        %383 = vmatpush2.msra.mxu0 %v331
        %384 = vmatprep.subr.mxu0 0.0
        %385 = vmatpush2.msra.mxu0 %v330
        %386 = vmatprep.subr.mxu0 0.0
        %387 = vmatpush2.msra.mxu0 %v329
        %388 = vmatprep.subr.mxu0 0.0
        %389 = vmatpush2.msra.mxu0 %v328
        %390 = vmatprep.subr.mxu0 0.0
        %391 = vmatpush2.msra.mxu0 %v327
        %392 = vmatprep.subr.mxu0 0.0
        %393 = vmatpush2.msra.mxu0 %v326
        %394 = vmatprep.subr.mxu0 0.0
        %395 = vmatpush2.msra.mxu0 %v325
        %396 = vmatprep.subr.mxu0 0.0
        %397 = vmatpush2.msra.mxu0 %v324
        %398 = vmatprep.subr.mxu0 0.0
        %399 = vmatpush2.msra.mxu0 %v323
        %400 = vmatprep.subr.mxu0 0.0
        %401 = vmatpush2.msra.mxu0 %v322
        %402 = vmatprep.subr.mxu0 0.0
        %403 = vmatpush2.msra.mxu0 %v321
        %404 = vmatprep.mubr.f32.mxu0 %v338
        %405 = vmatmul.mubr.f32.gmra.mxu0 %v304
        %v406 = vpop.f32.mrf.mxu0
        %v407 = vadd.f32 0.0, %v406
        %v408 = vpop.f32.mrf.mxu0
        %409 = vdwg.mxu0
        %v410 = vld [vmem:[%s2] sm:$0xf]
        %vm411 = vcmask 31744
        %v413 = vsel %vm411, %v407, 0
        %vm415 = vcmask 1043456
        %v417 = vsel %vm415, %v410, 0
        %419 = vmatprep.subr.mxu0 0.0
        %420 = vmatpush1.msra.mxu0 0.0
        %421 = vmatprep.subr.mxu0 0.0
        %422 = vmatpush1.msra.mxu0 0.0
        %423 = vmatprep.subr.mxu0 0.0
        %424 = vmatpush1.msra.mxu0 0.0
        %425 = vmatprep.subr.mxu0 0.0
        %426 = vmatpush1.msra.mxu0 0.0
        %427 = vmatprep.subr.mxu0 0.0
        %428 = vmatpush1.msra.mxu0 0.0
        %429 = vmatprep.subr.mxu0 0.0
        %430 = vmatpush1.msra.mxu0 0.0
        %431 = vmatprep.subr.mxu0 0.0
        %432 = vmatpush1.msra.mxu0 0.0
        %433 = vmatprep.subr.mxu0 0.0
        %434 = vmatpush1.msra.mxu0 0.0
        %435 = vmatprep.subr.mxu0 0.0
        %436 = vmatpush1.msra.mxu0 0.0
        %437 = vmatprep.subr.mxu0 0.0
        %438 = vmatpush1.msra.mxu0 0.0
        %439 = vmatprep.subr.mxu0 0.0
        %440 = vmatpush1.msra.mxu0 0.0
        %441 = vmatprep.subr.mxu0 0.0
        %442 = vmatpush1.msra.mxu0 0.0
        %443 = vmatprep.subr.mxu0 0.0
        %444 = vmatpush1.msra.mxu0 0.0
        %445 = vmatprep.subr.mxu0 0.0
        %446 = vmatpush1.msra.mxu0 0.0
        %447 = vmatprep.subr.mxu0 0.0
        %448 = vmatpush1.msra.mxu0 0.0
        %449 = vmatprep.subr.mxu0 0.0
        %450 = vmatpush1.msra.mxu0 %v417
        %451 = vmatprep.subr.mxu0 0.0
        %452 = vmatpush2.msra.mxu0 0.0
        %453 = vmatprep.subr.mxu0 0.0
        %454 = vmatpush2.msra.mxu0 0.0
        %455 = vmatprep.subr.mxu0 0.0
        %456 = vmatpush2.msra.mxu0 0.0
        %457 = vmatprep.subr.mxu0 0.0
        %458 = vmatpush2.msra.mxu0 0.0
        %459 = vmatprep.subr.mxu0 0.0
        %460 = vmatpush2.msra.mxu0 0.0
        %461 = vmatprep.subr.mxu0 0.0
        %462 = vmatpush2.msra.mxu0 0.0
        %463 = vmatprep.subr.mxu0 0.0
        %464 = vmatpush2.msra.mxu0 0.0
        %465 = vmatprep.subr.mxu0 0.0
        %466 = vmatpush2.msra.mxu0 0.0
        %467 = vmatprep.subr.mxu0 0.0
        %468 = vmatpush2.msra.mxu0 0.0
        %469 = vmatprep.subr.mxu0 0.0
        %470 = vmatpush2.msra.mxu0 0.0
        %471 = vmatprep.subr.mxu0 0.0
        %472 = vmatpush2.msra.mxu0 0.0
        %473 = vmatprep.subr.mxu0 0.0
        %474 = vmatpush2.msra.mxu0 0.0
        %475 = vmatprep.subr.mxu0 0.0
        %476 = vmatpush2.msra.mxu0 0.0
        %477 = vmatprep.subr.mxu0 0.0
        %478 = vmatpush2.msra.mxu0 0.0
        %479 = vmatprep.subr.mxu0 0.0
        %480 = vmatpush2.msra.mxu0 0.0
        %481 = vmatprep.subr.mxu0 0.0
        %482 = vmatpush2.msra.mxu0 0.0
        %483 = vmatprep.mubr.f32.mxu0 0.0
        %484 = vmatmul.mubr.f32.gmra.mxu0 %v413
        %v485 = vpop.f32.mrf.mxu0
        %v486 = vadd.f32 0.0, %v485
        %v487 = vpop.f32.mrf.mxu0
        %488 = vdwg.mxu0
        %v489 = vld [vmem:[%s3] sm:$0xf]
        %v490 = vmul.f32 %v486, %v489
        %vm491 = vcmask 125952
        %v492 = vsel %vm491, %v490, 0.0
        %v493 = vrot.slane %v492, 4
        %v494 = vadd.f32 %v492, %v493
        %v495 = vrot.slane %v494, 2
        %v496 = vadd.f32 %v494, %v495
        %v497 = vrot.slane %v496, 1
        %v498 = vadd.f32 %v496, %v497
        %v499 = vld [vmem:[%s5] sm:$0xff]
        %v500 = vld [vmem:[%s5 + $0x8] sm:$0xff]
        %vm501 = vcmask 130048
        %v503 = vsel %vm501, %v498, 0
        %505 = vmatprep.subr.mxu0 0.0
        %506 = vmatpush1.msra.mxu0 0.0
        %507 = vmatprep.subr.mxu0 0.0
        %508 = vmatpush1.msra.mxu0 0.0
        %509 = vmatprep.subr.mxu0 0.0
        %510 = vmatpush1.msra.mxu0 0.0
        %511 = vmatprep.subr.mxu0 0.0
        %512 = vmatpush1.msra.mxu0 0.0
        %513 = vmatprep.subr.mxu0 0.0
        %514 = vmatpush1.msra.mxu0 0.0
        %515 = vmatprep.subr.mxu0 0.0
        %516 = vmatpush1.msra.mxu0 0.0
        %517 = vmatprep.subr.mxu0 0.0
        %518 = vmatpush1.msra.mxu0 0.0
        %519 = vmatprep.subr.mxu0 0.0
        %520 = vmatpush1.msra.mxu0 0.0
        %521 = vmatprep.subr.mxu0 0.0
        %522 = vmatpush1.msra.mxu0 0.0
        %523 = vmatprep.subr.mxu0 0.0
        %524 = vmatpush1.msra.mxu0 0.0
        %525 = vmatprep.subr.mxu0 0.0
        %526 = vmatpush1.msra.mxu0 0.0
        %527 = vmatprep.subr.mxu0 0.0
        %528 = vmatpush1.msra.mxu0 0.0
        %529 = vmatprep.subr.mxu0 0.0
        %530 = vmatpush1.msra.mxu0 0.0
        %531 = vmatprep.subr.mxu0 0.0
        %532 = vmatpush1.msra.mxu0 0.0
        %533 = vmatprep.subr.mxu0 0.0
        %534 = vmatpush1.msra.mxu0 %v500
        %535 = vmatprep.subr.mxu0 0.0
        %536 = vmatpush1.msra.mxu0 %v499
        %537 = vmatprep.subr.mxu0 0.0
        %538 = vmatpush2.msra.mxu0 0.0
        %539 = vmatprep.subr.mxu0 0.0
        %540 = vmatpush2.msra.mxu0 0.0
        %541 = vmatprep.subr.mxu0 0.0
        %542 = vmatpush2.msra.mxu0 0.0
        %543 = vmatprep.subr.mxu0 0.0
        %544 = vmatpush2.msra.mxu0 0.0
        %545 = vmatprep.subr.mxu0 0.0
        %546 = vmatpush2.msra.mxu0 0.0
        %547 = vmatprep.subr.mxu0 0.0
        %548 = vmatpush2.msra.mxu0 0.0
        %549 = vmatprep.subr.mxu0 0.0
        %550 = vmatpush2.msra.mxu0 0.0
        %551 = vmatprep.subr.mxu0 0.0
        %552 = vmatpush2.msra.mxu0 0.0
        %553 = vmatprep.subr.mxu0 0.0
        %554 = vmatpush2.msra.mxu0 0.0
        %555 = vmatprep.subr.mxu0 0.0
        %556 = vmatpush2.msra.mxu0 0.0
        %557 = vmatprep.subr.mxu0 0.0
        %558 = vmatpush2.msra.mxu0 0.0
        %559 = vmatprep.subr.mxu0 0.0
        %560 = vmatpush2.msra.mxu0 0.0
        %561 = vmatprep.subr.mxu0 0.0
        %562 = vmatpush2.msra.mxu0 0.0
        %563 = vmatprep.subr.mxu0 0.0
        %564 = vmatpush2.msra.mxu0 0.0
        %565 = vmatprep.subr.mxu0 0.0
        %566 = vmatpush2.msra.mxu0 0.0
        %567 = vmatprep.subr.mxu0 0.0
        %568 = vmatpush2.msra.mxu0 0.0
        %569 = vmatprep.mubr.f32.mxu0 0.0
        %570 = vmatmul.mubr.f32.gmra.mxu0 %v503
        %v571 = vpop.f32.mrf.mxu0
        %v572 = vadd.f32 0.0, %v571
        %v573 = vpop.f32.mrf.mxu0
        %574 = vdwg.mxu0
        %v575 = vmax.f32 %v572, 0.0
        %v576 = vld [vmem:[%s6] sm:$0xff]
        %v577 = vld [vmem:[%s7] sm:$0x1]
        %vm578 = vcmask 64512
        %v580 = vsel %vm578, %v575, 0
        %582 = vmatprep.subr.mxu0 0.0
        %583 = vmatpush1.msra.mxu0 0.0
        %584 = vmatprep.subr.mxu0 0.0
        %585 = vmatpush1.msra.mxu0 0.0
        %586 = vmatprep.subr.mxu0 0.0
        %587 = vmatpush1.msra.mxu0 0.0
        %588 = vmatprep.subr.mxu0 0.0
        %589 = vmatpush1.msra.mxu0 0.0
        %590 = vmatprep.subr.mxu0 0.0
        %591 = vmatpush1.msra.mxu0 0.0
        %592 = vmatprep.subr.mxu0 0.0
        %593 = vmatpush1.msra.mxu0 0.0
        %594 = vmatprep.subr.mxu0 0.0
        %595 = vmatpush1.msra.mxu0 0.0
        %596 = vmatprep.subr.mxu0 0.0
        %597 = vmatpush1.msra.mxu0 0.0
        %598 = vmatprep.subr.mxu0 0.0
        %599 = vmatpush1.msra.mxu0 0.0
        %600 = vmatprep.subr.mxu0 0.0
        %601 = vmatpush1.msra.mxu0 0.0
        %602 = vmatprep.subr.mxu0 0.0
        %603 = vmatpush1.msra.mxu0 0.0
        %604 = vmatprep.subr.mxu0 0.0
        %605 = vmatpush1.msra.mxu0 0.0
        %606 = vmatprep.subr.mxu0 0.0
        %607 = vmatpush1.msra.mxu0 0.0
        %608 = vmatprep.subr.mxu0 0.0
        %609 = vmatpush1.msra.mxu0 0.0
        %610 = vmatprep.subr.mxu0 0.0
        %611 = vmatpush1.msra.mxu0 0.0
        %612 = vmatprep.subr.mxu0 0.0
        %613 = vmatpush1.msra.mxu0 %v576
        %614 = vmatprep.subr.mxu0 0.0
        %615 = vmatpush2.msra.mxu0 0.0
        %616 = vmatprep.subr.mxu0 0.0
        %617 = vmatpush2.msra.mxu0 0.0
        %618 = vmatprep.subr.mxu0 0.0
        %619 = vmatpush2.msra.mxu0 0.0
        %620 = vmatprep.subr.mxu0 0.0
        %621 = vmatpush2.msra.mxu0 0.0
        %622 = vmatprep.subr.mxu0 0.0
        %623 = vmatpush2.msra.mxu0 0.0
        %624 = vmatprep.subr.mxu0 0.0
        %625 = vmatpush2.msra.mxu0 0.0
        %626 = vmatprep.subr.mxu0 0.0
        %627 = vmatpush2.msra.mxu0 0.0
        %628 = vmatprep.subr.mxu0 0.0
        %629 = vmatpush2.msra.mxu0 0.0
        %630 = vmatprep.subr.mxu0 0.0
        %631 = vmatpush2.msra.mxu0 0.0
        %632 = vmatprep.subr.mxu0 0.0
        %633 = vmatpush2.msra.mxu0 0.0
        %634 = vmatprep.subr.mxu0 0.0
        %635 = vmatpush2.msra.mxu0 0.0
        %636 = vmatprep.subr.mxu0 0.0
        %637 = vmatpush2.msra.mxu0 0.0
        %638 = vmatprep.subr.mxu0 0.0
        %639 = vmatpush2.msra.mxu0 0.0
        %640 = vmatprep.subr.mxu0 0.0
        %641 = vmatpush2.msra.mxu0 0.0
        %642 = vmatprep.subr.mxu0 0.0
        %643 = vmatpush2.msra.mxu0 0.0
        %644 = vmatprep.subr.mxu0 0.0
        %645 = vmatpush2.msra.mxu0 0.0
        %646 = vmatprep.mubr.f32.mxu0 0.0
        %647 = vmatmul.mubr.f32.gmra.mxu0 %v580
        %v648 = vpop.f32.mrf.mxu0
        %v649 = vadd.f32 %v577, %v648
        %v650 = vpop.f32.mrf.mxu0
        %651 = vdwg.mxu0
        %v652 = vxor.u32 %v649, 2147483648
        %v653 = vmul.f32 %v652, 1.442695
        %v654 = vpow.pop %v653
        %v655 = vadd.f32 %v654, 1.0
        %v656 = vrcp.pop %v655
        %v657 = vmul.f32 1.0, %v656
        %v658 = vld [vmem:[%s4] sm:$0xf]
        %v659 = vlaneseq
        %v660 = vshrl.u32 %v659, 7
        %v661 = vsub.s32 0, %v660
        %v662 = vrot.slane %v657, %v661
        %v663 = vmul.f32 %v658, %v662
        %vm664 = vcmask 27648
        %v665 = vsel %vm664, %v663, 0.0
        %666 = vadd.xlane.f32.xlu0 %v665
        %v667 = vpop.xlane.xlu0 %666
        %v670 = vunpack.c.l.s4 839922192
        %v671 = vunpack.c.0.s8 %v670
        %v672 = vlaneseq
        %v673 = vshrl.u32 %v672, 7
        %v674 = vsub.s32 %v671, %v673
        %v675 = vrot.slane %v667, %v674
        %v677 = vmul.f32 %v304, %v675
        %678 = vst [vmem:[%s298] sm:$0xff] %v677
        %s679 = sand.u32 %s203, 1
        %s680 = scalar_lea.sflag [#allocation3], %s679
        %s681 = sand.u32 %s203, 1
        %s682 = smul.addr %s681, 8
        %s683 = scalar_lea.vmem [#allocation2], %s682
        // Predicated region
        $region53: #{tpu_custom_call.1} parent=51 // pred_check
          %p684 = pneg %p213
        $region54: #{tpu_custom_call.1} parent=51 // pred_check_branch
          %686 = sbr.rel (%p684) target = $region56
        $region55: #{tpu_custom_call.1} parent=51 // pred_region
          %s688 = ssub.s32 128, 128
          %689 = vsyncadd %s680, %s688
          %s690 = smul.addr %s22, 2
          %s691 = smul.addr %s690, 64
          %s692 = scalar_lea.hbm %s8, %s691
          %s694 = sshll.u32 %s683, 4
          %s695 = int_to_ptr.vmem [resolvable:$true] %s694
          %697 = dma.vmem_to_hbm [thread:$0]  %s695, 128, %s692, %s680
        $region56: #{tpu_custom_call.1} parent=51 // pred_fallthru
          _
      $region52: #{tpu_custom_call.1} parent=5 // pred_fallthru
        _
      %p698 = scmp.le.s32.totalorder 2, %s17
      // Predicated region
      $region57: #{tpu_custom_call.1} parent=5 // pred_check
        %p699 = pneg %p698
      $region58: #{tpu_custom_call.1} parent=5 // pred_check_branch
        %701 = sbr.rel (%p699) target = $region60
      $region59: #{tpu_custom_call.1} parent=5 // pred_region
        %s702 = ssub.s32 %s17, 2
        // Predicated region
        $region61: #{tpu_custom_call.1} parent=59 // pred_check
          %p703 = pneg %p219
        $region62: #{tpu_custom_call.1} parent=59 // pred_check_branch
          %705 = sbr.rel (%p703) target = $region64
        $region63: #{tpu_custom_call.1} parent=59 // pred_region
          %s706 = sand.u32 %s204, 1
          %s707 = scalar_lea.sflag [#allocation3], %s706
          %s708 = sand.u32 %s204, 1
          %s709 = smul.addr %s708, 8
          %s710 = scalar_lea.vmem [#allocation2], %s709
          %711 = dma.done %s707, 128
        $region64: #{tpu_custom_call.1} parent=59 // pred_fallthru
          _
      $region60: #{tpu_custom_call.1} parent=5 // pred_fallthru
        _
    $region6: #{tpu_custom_call.1} parent=1 // loop_footer
      %s21 = sadd.s32 1, %s17
    $region7: #{tpu_custom_call.1} parent=1 // loop_footer_branch
      %16 = sbr.rel target = $region3
    $region8: #{tpu_custom_call.1} parent=1 // loop_exit
      _
    %712 = vsyncpa [#allocation3], 1
    %s713 = scalar_lea.sflag [#allocation3], 1
    %714 = vsyncpa %s713, 1

</llo_original>
